<compile_context>
chip_gen: v5e
topology: v5e:2x2
jax: 0.10.0
libtpu: 0.0.40
codegen_flags: <defaults>
</compile_context>

<pallas_src>
import jax
import jax.numpy as jnp
from jax.experimental import pallas as pl
from jax.experimental.pallas import tpu as pltpu


def _qnet_kernel(x_ref, w1_ref, b1_ref, w2_ref, b2_ref, w3_ref, b3_ref, o_ref):
    # Feature-major: batch rides the 128-lane axis, so all tiles are lane-dense.
    cdt = w1_ref.dtype                                    # compute (MXU) dtype
    x = x_ref[...]                                        # [S,  tb]  (cdt)
    h1 = jnp.dot(w1_ref[...], x, preferred_element_type=jnp.float32)
    h1 = jnp.maximum(h1 + b1_ref[...], 0.0)               # [H1, tb]  f32 epilogue
    h2 = jnp.dot(w2_ref[...], h1.astype(cdt), preferred_element_type=jnp.float32)
    h2 = jnp.maximum(h2 + b2_ref[...], 0.0)               # [H2, tb]  f32 epilogue
    out = jnp.dot(w3_ref[...], h2.astype(cdt), preferred_element_type=jnp.float32)
    o_ref[...] = (out + b3_ref[...]).astype(o_ref.dtype)  # [A,  tb]  lane-dense store


def _round_up(x, m):
    return ((x + m - 1) // m) * m


def _choose_batch_tile(B, batch_tile):
    """Lane-aligned batch tile, big enough to amortize per-step overhead but
    split into >=2 comparable steps (v7x megacore) whenever B > one vreg row."""
    if B <= 128:
        return B                      # single block; block dim == full array dim
    batch_tile = max(128, _round_up(batch_tile, 128))
    n_steps = max(2, pl.cdiv(B, batch_tile))
    tb = _round_up(pl.cdiv(B, n_steps), 128)
    return min(tb, batch_tile)


def qnetwork_forward(state, params, *, dueling=False, batch_tile=2048,
                     compute_dtype=jnp.bfloat16):
    """state: [B, state_size] float32.

    params holds PyTorch-layout tensors: W is [out_features, in_features] and
    b is [out_features, 1].  Returns [B, action_size] float32.
    """
    w1, b1 = params["fc1"]
    w2, b2 = params["fc2"]
    w3, b3 = params["fc3"]
    if dueling:
        # Fold the state-value head into fc3: one matmul, no extra operands.
        wv, bv = params["state_value"]
        w3 = w3 + wv                 # [A, H2] + [1, H2] -> [A, H2]
        b3 = b3 + bv                 # [A, 1]  + [1, 1]  -> [A, 1]

    B, S = state.shape
    H1 = w1.shape[0]
    H2 = w2.shape[0]
    A = w3.shape[0]

    # Feature-major activations (batch on lanes); bf16 halves the streamed DMA.
    x_t = state.T.astype(compute_dtype)                   # [S, B]
    w1c = w1.astype(compute_dtype)
    w2c = w2.astype(compute_dtype)
    w3c = w3.astype(compute_dtype)
    b1f = b1.astype(jnp.float32)
    b2f = b2.astype(jnp.float32)
    b3f = b3.astype(jnp.float32)

    tb = _choose_batch_tile(B, batch_tile)
    grid = (pl.cdiv(B, tb),)

    const = lambda i: (0, 0)         # weights/biases stay VMEM-resident
    out_t = pl.pallas_call(
        _qnet_kernel,
        out_shape=jax.ShapeDtypeStruct((A, B), jnp.float32),
        grid=grid,
        in_specs=[
            pl.BlockSpec((S, tb), lambda i: (0, i)),   # activations, streamed
            pl.BlockSpec((H1, S), const),
            pl.BlockSpec((H1, 1), const),
            pl.BlockSpec((H2, H1), const),
            pl.BlockSpec((H2, 1), const),
            pl.BlockSpec((A, H2), const),
            pl.BlockSpec((A, 1), const),
        ],
        out_specs=pl.BlockSpec((A, tb), lambda i: (0, i)),
        compiler_params=pltpu.CompilerParams(
            dimension_semantics=("parallel",),
        ),
    )(x_t, w1c, b1f, w2c, b2f, w3c, b3f)
    return out_t.T                                        # [B, A]


def _init_linear(key, in_features, out_features):
    """PyTorch nn.Linear-style uniform init; W is [out, in], b is [out, 1]."""
    bound = 1.0 / jnp.sqrt(jnp.float32(in_features))
    kw, kb = jax.random.split(key)
    w = jax.random.uniform(kw, (out_features, in_features), jnp.float32, -bound, bound)
    b = jax.random.uniform(kb, (out_features, 1), jnp.float32, -bound, bound)
    return w, b


def init_qnetwork_params(key, state_size, action_size, fc1_units=64, fc2_units=64):
    k1, k2, k3, k4 = jax.random.split(key, 4)
    return {
        "fc1": _init_linear(k1, state_size, fc1_units),
        "fc2": _init_linear(k2, fc1_units, fc2_units),
        "fc3": _init_linear(k3, fc2_units, action_size),
        "state_value": _init_linear(k4, fc2_units, 1),
    }


def _reference_forward(state, params, *, dueling=False):
    """Plain-JAX f32 reference mirroring the PyTorch forward."""
    w1, b1 = params["fc1"]
    w2, b2 = params["fc2"]
    w3, b3 = params["fc3"]
    wv, bv = params["state_value"]
    x = jnp.maximum(state @ w1.T + b1[:, 0], 0.0)
    x = jnp.maximum(x @ w2.T + b2[:, 0], 0.0)
    out = x @ w3.T + b3[:, 0]
    if dueling:
        out = out + (x @ wv.T + bv[:, 0])
    return out


if __name__ == "__main__":
    key = jax.random.PRNGKey(0)
    kp, kx, kx2 = jax.random.split(key, 3)

    batch = 2
    state_size = 8
    action_size = 4
    fc1_units = 64
    fc2_units = 64

    params = init_qnetwork_params(kp, state_size, action_size, fc1_units, fc2_units)
    state = jax.random.normal(kx, (batch, state_size), jnp.float32)

    # f32 compute path: tight check vs reference (non-dueling and dueling).
    out = qnetwork_forward(state, params, dueling=False, compute_dtype=jnp.float32)
    out = jax.block_until_ready(out)
    ref = _reference_forward(state, params, dueling=False)
    assert out.shape == (batch, action_size)
    assert jnp.allclose(out, ref, atol=1e-4, rtol=1e-4)

    out_d = qnetwork_forward(state, params, dueling=True, compute_dtype=jnp.float32)
    out_d = jax.block_until_ready(out_d)
    ref_d = _reference_forward(state, params, dueling=True)
    assert jnp.allclose(out_d, ref_d, atol=1e-4, rtol=1e-4)

    # Default bf16 MXU path on a larger, unaligned batch: exercises the
    # lane-aligned batch grid (>=2 steps) and the partial last tile.
    big_batch = 300
    state_big = jax.random.normal(kx2, (big_batch, state_size), jnp.float32)
    out_big = qnetwork_forward(state_big, params, dueling=True)   # bf16 default
    out_big = jax.block_until_ready(out_big)
    ref_big = _reference_forward(state_big, params, dueling=True)
    assert out_big.shape == (big_batch, action_size)
    assert jnp.allclose(out_big, ref_big, atol=5e-2, rtol=5e-2)

    print("KERNEL_OK")
</pallas_src>

<mosaic_0001>
module attributes {stable_mosaic.version = 11 : i64} {
  func.func @_qnet_kernel(%arg0: i32, %arg1: memref<8x2xf32, #tpu.memory_space<vmem>>, %arg2: memref<64x8xf32, #tpu.memory_space<vmem>>, %arg3: memref<64x1xf32, #tpu.memory_space<vmem>>, %arg4: memref<64x64xf32, #tpu.memory_space<vmem>>, %arg5: memref<64x1xf32, #tpu.memory_space<vmem>>, %arg6: memref<4x64xf32, #tpu.memory_space<vmem>>, %arg7: memref<4x1xf32, #tpu.memory_space<vmem>>, %arg8: memref<4x2xf32, #tpu.memory_space<vmem>>) attributes {dimension_semantics = [#tpu.dimension_semantics<parallel>], iteration_bounds = array<i64: 1>, scalar_prefetch = 0 : i64, scratch_operands = 0 : i64, tpu.core_type = #tpu.core_type<tc>, window_params = [{transform_indices = @transform_0, window_bounds = array<i64: 8, 2>}, {pipeline_mode = #tpu.pipeline_mode<synchronous>, transform_indices = @transform_1, window_bounds = array<i64: 64, 8>}, {pipeline_mode = #tpu.pipeline_mode<synchronous>, transform_indices = @transform_2, window_bounds = array<i64: 64, 1>}, {pipeline_mode = #tpu.pipeline_mode<synchronous>, transform_indices = @transform_3, window_bounds = array<i64: 64, 64>}, {pipeline_mode = #tpu.pipeline_mode<synchronous>, transform_indices = @transform_4, window_bounds = array<i64: 64, 1>}, {pipeline_mode = #tpu.pipeline_mode<synchronous>, transform_indices = @transform_5, window_bounds = array<i64: 4, 64>}, {pipeline_mode = #tpu.pipeline_mode<synchronous>, transform_indices = @transform_6, window_bounds = array<i64: 4, 1>}, {transform_indices = @transform_7, window_bounds = array<i64: 4, 2>}]} {
    %c0 = arith.constant 0 : index
    %c0_0 = arith.constant 0 : index
    %0 = vector.load %arg1[%c0, %c0_0] : memref<8x2xf32, #tpu.memory_space<vmem>>, vector<8x2xf32>
    %c0_1 = arith.constant 0 : index
    %c0_2 = arith.constant 0 : index
    %1 = vector.load %arg2[%c0_1, %c0_2] : memref<64x8xf32, #tpu.memory_space<vmem>>, vector<64x8xf32>
    %cst = arith.constant dense<0.000000e+00> : vector<64x2xf32>
    %2 = tpu.matmul %1, %0, %cst {dimension_numbers = #tpu.dot_dimension_numbers<[1], [0], [0], [1], [0, 0, 1, 1], [], []>} : vector<64x8xf32>, vector<8x2xf32>, vector<64x2xf32> -> vector<64x2xf32>
    %c0_3 = arith.constant 0 : index
    %c0_4 = arith.constant 0 : index
    %3 = vector.load %arg3[%c0_3, %c0_4] : memref<64x1xf32, #tpu.memory_space<vmem>>, vector<64x1xf32>
    %4 = vector.broadcast %3 : vector<64x1xf32> to vector<64x2xf32>
    %5 = arith.addf %2, %4 : vector<64x2xf32>
    %cst_5 = arith.constant 0.000000e+00 : f32
    %6 = vector.broadcast %cst_5 : f32 to vector<64x2xf32>
    %7 = arith.maximumf %5, %6 : vector<64x2xf32>
    %c0_6 = arith.constant 0 : index
    %c0_7 = arith.constant 0 : index
    %8 = vector.load %arg4[%c0_6, %c0_7] : memref<64x64xf32, #tpu.memory_space<vmem>>, vector<64x64xf32>
    %cst_8 = arith.constant dense<0.000000e+00> : vector<64x2xf32>
    %9 = tpu.matmul %8, %7, %cst_8 {dimension_numbers = #tpu.dot_dimension_numbers<[1], [0], [0], [1], [0, 0, 1, 1], [], []>} : vector<64x64xf32>, vector<64x2xf32>, vector<64x2xf32> -> vector<64x2xf32>
    %c0_9 = arith.constant 0 : index
    %c0_10 = arith.constant 0 : index
    %10 = vector.load %arg5[%c0_9, %c0_10] : memref<64x1xf32, #tpu.memory_space<vmem>>, vector<64x1xf32>
    %11 = vector.broadcast %10 : vector<64x1xf32> to vector<64x2xf32>
    %12 = arith.addf %9, %11 : vector<64x2xf32>
    %cst_11 = arith.constant 0.000000e+00 : f32
    %13 = vector.broadcast %cst_11 : f32 to vector<64x2xf32>
    %14 = arith.maximumf %12, %13 : vector<64x2xf32>
    %c0_12 = arith.constant 0 : index
    %c0_13 = arith.constant 0 : index
    %15 = vector.load %arg6[%c0_12, %c0_13] : memref<4x64xf32, #tpu.memory_space<vmem>>, vector<4x64xf32>
    %cst_14 = arith.constant dense<0.000000e+00> : vector<4x2xf32>
    %16 = tpu.matmul %15, %14, %cst_14 {dimension_numbers = #tpu.dot_dimension_numbers<[1], [0], [0], [1], [0, 0, 1, 1], [], []>} : vector<4x64xf32>, vector<64x2xf32>, vector<4x2xf32> -> vector<4x2xf32>
    %c0_15 = arith.constant 0 : index
    %c0_16 = arith.constant 0 : index
    %17 = vector.load %arg7[%c0_15, %c0_16] : memref<4x1xf32, #tpu.memory_space<vmem>>, vector<4x1xf32>
    %18 = vector.broadcast %17 : vector<4x1xf32> to vector<4x2xf32>
    %19 = arith.addf %16, %18 : vector<4x2xf32>
    %c0_17 = arith.constant 0 : index
    %c0_18 = arith.constant 0 : index
    %20 = vector.load %arg8[%c0_17, %c0_18] : memref<4x2xf32, #tpu.memory_space<vmem>>, vector<4x2xf32>
    tpu.vector_store %arg8[%c0_17, %c0_18], %19 {strides = array<i32>} : memref<4x2xf32, #tpu.memory_space<vmem>>, vector<4x2xf32>,
    return
  }
  func.func @transform_0(%arg0: i32) -> (i32, i32) {
    %c0_i32 = arith.constant 0 : i32
    %c0_i32_0 = arith.constant 0 : i32
    return %c0_i32, %arg0 : i32, i32
  }
  func.func @transform_1(%arg0: i32) -> (i32, i32) {
    %c0_i32 = arith.constant 0 : i32
    %c0_i32_0 = arith.constant 0 : i32
    %c0_i32_1 = arith.constant 0 : i32
    return %c0_i32, %c0_i32_0 : i32, i32
  }
  func.func @transform_2(%arg0: i32) -> (i32, i32) {
    %c0_i32 = arith.constant 0 : i32
    %c0_i32_0 = arith.constant 0 : i32
    %c0_i32_1 = arith.constant 0 : i32
    return %c0_i32, %c0_i32_0 : i32, i32
  }
  func.func @transform_3(%arg0: i32) -> (i32, i32) {
    %c0_i32 = arith.constant 0 : i32
    %c0_i32_0 = arith.constant 0 : i32
    %c0_i32_1 = arith.constant 0 : i32
    return %c0_i32, %c0_i32_0 : i32, i32
  }
  func.func @transform_4(%arg0: i32) -> (i32, i32) {
    %c0_i32 = arith.constant 0 : i32
    %c0_i32_0 = arith.constant 0 : i32
    %c0_i32_1 = arith.constant 0 : i32
    return %c0_i32, %c0_i32_0 : i32, i32
  }
  func.func @transform_5(%arg0: i32) -> (i32, i32) {
    %c0_i32 = arith.constant 0 : i32
    %c0_i32_0 = arith.constant 0 : i32
    %c0_i32_1 = arith.constant 0 : i32
    return %c0_i32, %c0_i32_0 : i32, i32
  }
  func.func @transform_6(%arg0: i32) -> (i32, i32) {
    %c0_i32 = arith.constant 0 : i32
    %c0_i32_0 = arith.constant 0 : i32
    %c0_i32_1 = arith.constant 0 : i32
    return %c0_i32, %c0_i32_0 : i32, i32
  }
  func.func @transform_7(%arg0: i32) -> (i32, i32) {
    %c0_i32 = arith.constant 0 : i32
    %c0_i32_0 = arith.constant 0 : i32
    return %c0_i32, %arg0 : i32, i32
  }
}

</mosaic_0001>

<llo_original>
// kernel: tpu_custom_call.1
$region0: #{tpu_custom_call.1}
  #allocation0 [shape = 'u32[]', space=smem, size = 0x4, offset = 0x4, fixed_abs, tag = 'smem constant byte address 0x4 - core index']
  #allocation1 [shape = 'u32[72,128]{1,0:T(1,128)}', space=vmem, size = 0x9000, scoped, tag = 'internal scratch']
  %s0 = inlined_call_operand.vmem [shape: f32[8,2], index: 0, kind: input, shape index: {}]
  %s1 = inlined_call_operand.vmem [shape: f32[64,8], index: 1, kind: input, shape index: {}]
  %s2 = inlined_call_operand.vmem [shape: f32[64,1], index: 2, kind: input, shape index: {}]
  %s3 = inlined_call_operand.vmem [shape: f32[64,64], index: 3, kind: input, shape index: {}]
  %s4 = inlined_call_operand.vmem [shape: f32[64,1], index: 4, kind: input, shape index: {}]
  %s5 = inlined_call_operand.vmem [shape: f32[4,64], index: 5, kind: input, shape index: {}]
  %s6 = inlined_call_operand.vmem [shape: f32[4,1], index: 6, kind: input, shape index: {}]
  %s7 = inlined_call_operand.vmem [shape: f32[4,2], index: 7, kind: output, shape index: {}]
  %s8 = sld [smem:[#allocation0]]
  $region38: #{tpu_custom_call.1} parent=0
    _
  %s10 = ssub.s32 1, %s8
  %s11 = scalar_select 0, %s10, %s8
  // Predicated region
  $region2: #{tpu_custom_call.1} parent=0 // pred_check
    _
  $region3: #{tpu_custom_call.1} parent=0 // pred_check_branch
    %13 = sbr.rel (0) target = $region5
  $region4: #{tpu_custom_call.1} parent=0 // pred_region
    _
  $region5: #{tpu_custom_call.1} parent=0 // pred_fallthru
    _
  // Predicated region
  $region6: #{tpu_custom_call.1} parent=0 // pred_check
    _
  $region7: #{tpu_custom_call.1} parent=0 // pred_check_branch
    %15 = sbr.rel (0) target = $region9
  $region8: #{tpu_custom_call.1} parent=0 // pred_region
    _
  $region9: #{tpu_custom_call.1} parent=0 // pred_fallthru
    _
  // Predicated region
  $region10: #{tpu_custom_call.1} parent=0 // pred_check
    _
  $region11: #{tpu_custom_call.1} parent=0 // pred_check_branch
    %17 = sbr.rel (0) target = $region13
  $region12: #{tpu_custom_call.1} parent=0 // pred_region
    _
  $region13: #{tpu_custom_call.1} parent=0 // pred_fallthru
    _
  // Predicated region
  $region14: #{tpu_custom_call.1} parent=0 // pred_check
    _
  $region15: #{tpu_custom_call.1} parent=0 // pred_check_branch
    %19 = sbr.rel (0) target = $region17
  $region16: #{tpu_custom_call.1} parent=0 // pred_region
    _
  $region17: #{tpu_custom_call.1} parent=0 // pred_fallthru
    _
  // Predicated region
  $region18: #{tpu_custom_call.1} parent=0 // pred_check
    _
  $region19: #{tpu_custom_call.1} parent=0 // pred_check_branch
    %21 = sbr.rel (0) target = $region21
  $region20: #{tpu_custom_call.1} parent=0 // pred_region
    _
  $region21: #{tpu_custom_call.1} parent=0 // pred_fallthru
    _
  // Predicated region
  $region22: #{tpu_custom_call.1} parent=0 // pred_check
    _
  $region23: #{tpu_custom_call.1} parent=0 // pred_check_branch
    %23 = sbr.rel (0) target = $region25
  $region24: #{tpu_custom_call.1} parent=0 // pred_region
    _
  $region25: #{tpu_custom_call.1} parent=0 // pred_fallthru
    _
  // Predicated region
  $region26: #{tpu_custom_call.1} parent=0 // pred_check
    _
  $region27: #{tpu_custom_call.1} parent=0 // pred_check_branch
    %25 = sbr.rel (0) target = $region29
  $region28: #{tpu_custom_call.1} parent=0 // pred_region
    _
  $region29: #{tpu_custom_call.1} parent=0 // pred_fallthru
    _
  %v26 = vld [vmem:[%s0] sm:$0xff]
  %v27 = vld [vmem:[%s1] sm:$0xff]
  %v28 = vld [vmem:[%s1 + $0x8] sm:$0xff]
  %v29 = vld [vmem:[%s1 + $0x10] sm:$0xff]
  %v30 = vld [vmem:[%s1 + $0x18] sm:$0xff]
  %v31 = vld [vmem:[%s1 + $0x20] sm:$0xff]
  %v32 = vld [vmem:[%s1 + $0x28] sm:$0xff]
  %v33 = vld [vmem:[%s1 + $0x30] sm:$0xff]
  %v34 = vld [vmem:[%s1 + $0x38] sm:$0xff]
  %v35 = vld [vmem:[%s2] sm:$0xff]
  %v36 = vld [vmem:[%s2 + $0x8] sm:$0xff]
  %v37 = vld [vmem:[%s2 + $0x10] sm:$0xff]
  %v38 = vld [vmem:[%s2 + $0x18] sm:$0xff]
  %v39 = vld [vmem:[%s2 + $0x20] sm:$0xff]
  %v40 = vld [vmem:[%s2 + $0x28] sm:$0xff]
  %v41 = vld [vmem:[%s2 + $0x30] sm:$0xff]
  %v42 = vld [vmem:[%s2 + $0x38] sm:$0xff]
  %44 = vset.pattern.permute.xlu0 0
  %45 = vperm.xlu0 %44, %v35
  %v46 = vpop.permute.xlu0 %45
  %49 = vset.pattern.permute.xlu0 0
  %50 = vperm.xlu0 %49, %v36
  %v51 = vpop.permute.xlu0 %50
  %54 = vset.pattern.permute.xlu0 0
  %55 = vperm.xlu0 %54, %v37
  %v56 = vpop.permute.xlu0 %55
  %59 = vset.pattern.permute.xlu0 0
  %60 = vperm.xlu0 %59, %v38
  %v61 = vpop.permute.xlu0 %60
  %64 = vset.pattern.permute.xlu0 0
  %65 = vperm.xlu0 %64, %v39
  %v66 = vpop.permute.xlu0 %65
  %69 = vset.pattern.permute.xlu0 0
  %70 = vperm.xlu0 %69, %v40
  %v71 = vpop.permute.xlu0 %70
  %74 = vset.pattern.permute.xlu0 0
  %75 = vperm.xlu0 %74, %v41
  %v76 = vpop.permute.xlu0 %75
  %79 = vset.pattern.permute.xlu0 0
  %80 = vperm.xlu0 %79, %v42
  %v81 = vpop.permute.xlu0 %80
  %vm83 = vcmask 64512
  %v85 = vsel %vm83, %v27, 0
  %v88 = vsel %vm83, %v28, 0
  %v91 = vsel %vm83, %v29, 0
  %v94 = vsel %vm83, %v30, 0
  %v97 = vsel %vm83, %v31, 0
  %v100 = vsel %vm83, %v32, 0
  %v103 = vsel %vm83, %v33, 0
  %v106 = vsel %vm83, %v34, 0
  %108 = vmatpush.msra.mxu0 0.0
  %109 = vmatpush.msra.mxu0 0.0
  %110 = vmatpush.msra.mxu0 0.0
  %111 = vmatpush.msra.mxu0 0.0
  %112 = vmatpush.msra.mxu0 0.0
  %113 = vmatpush.msra.mxu0 0.0
  %114 = vmatpush.msra.mxu0 0.0
  %115 = vmatpush.msra.mxu0 0.0
  %116 = vmatpush.msra.mxu0 0.0
  %117 = vmatpush.msra.mxu0 0.0
  %118 = vmatpush.msra.mxu0 0.0
  %119 = vmatpush.msra.mxu0 0.0
  %120 = vmatpush.msra.mxu0 0.0
  %121 = vmatpush.msra.mxu0 0.0
  %122 = vmatpush.msra.mxu0 0.0
  %123 = vmatpush.msra.mxu0 %v26
  %124 = vmatmul.f32.gmra.mxu0 %v85
  %v125 = vpop.f32.mrf.mxu0
  %v126 = vadd.f32 %v46, %v125
  %127 = vmatmul.f32.gmra.mxu0 %v88
  %v128 = vpop.f32.mrf.mxu0
  %v129 = vadd.f32 %v51, %v128
  %130 = vmatmul.f32.gmra.mxu0 %v91
  %v131 = vpop.f32.mrf.mxu0
  %v132 = vadd.f32 %v56, %v131
  %133 = vmatmul.f32.gmra.mxu0 %v94
  %v134 = vpop.f32.mrf.mxu0
  %v135 = vadd.f32 %v61, %v134
  %136 = vmatmul.f32.gmra.mxu0 %v97
  %v137 = vpop.f32.mrf.mxu0
  %v138 = vadd.f32 %v66, %v137
  %139 = vmatmul.f32.gmra.mxu0 %v100
  %v140 = vpop.f32.mrf.mxu0
  %v141 = vadd.f32 %v71, %v140
  %142 = vmatmul.f32.gmra.mxu0 %v103
  %v143 = vpop.f32.mrf.mxu0
  %v144 = vadd.f32 %v76, %v143
  %145 = vmatmul.f32.gmra.mxu0 %v106
  %v146 = vpop.f32.mrf.mxu0
  %v147 = vadd.f32 %v81, %v146
  %148 = vdwg.mxu0
  %v149 = vmax.f32 %v126, 0.0
  %v150 = vmax.f32 %v129, 0.0
  %v151 = vmax.f32 %v132, 0.0
  %v152 = vmax.f32 %v135, 0.0
  %v153 = vmax.f32 %v138, 0.0
  %v154 = vmax.f32 %v141, 0.0
  %v155 = vmax.f32 %v144, 0.0
  %v156 = vmax.f32 %v147, 0.0
  %v157 = vld [vmem:[%s3] sm:$0xff]
  %v158 = vld [vmem:[%s3 + $0x8] sm:$0xff]
  %v159 = vld [vmem:[%s3 + $0x10] sm:$0xff]
  %v160 = vld [vmem:[%s3 + $0x18] sm:$0xff]
  %v161 = vld [vmem:[%s3 + $0x20] sm:$0xff]
  %v162 = vld [vmem:[%s3 + $0x28] sm:$0xff]
  %v163 = vld [vmem:[%s3 + $0x30] sm:$0xff]
  %v164 = vld [vmem:[%s3 + $0x38] sm:$0xff]
  %v165 = vld [vmem:[%s4] sm:$0xff]
  %v166 = vld [vmem:[%s4 + $0x8] sm:$0xff]
  %v167 = vld [vmem:[%s4 + $0x10] sm:$0xff]
  %v168 = vld [vmem:[%s4 + $0x18] sm:$0xff]
  %v169 = vld [vmem:[%s4 + $0x20] sm:$0xff]
  %v170 = vld [vmem:[%s4 + $0x28] sm:$0xff]
  %v171 = vld [vmem:[%s4 + $0x30] sm:$0xff]
  %v172 = vld [vmem:[%s4 + $0x38] sm:$0xff]
  %174 = vset.pattern.permute.xlu0 0
  %175 = vperm.xlu0 %174, %v165
  %v176 = vpop.permute.xlu0 %175
  %179 = vset.pattern.permute.xlu0 0
  %180 = vperm.xlu0 %179, %v166
  %v181 = vpop.permute.xlu0 %180
  %184 = vset.pattern.permute.xlu0 0
  %185 = vperm.xlu0 %184, %v167
  %v186 = vpop.permute.xlu0 %185
  %189 = vset.pattern.permute.xlu0 0
  %190 = vperm.xlu0 %189, %v168
  %v191 = vpop.permute.xlu0 %190
  %194 = vset.pattern.permute.xlu0 0
  %195 = vperm.xlu0 %194, %v169
  %v196 = vpop.permute.xlu0 %195
  %199 = vset.pattern.permute.xlu0 0
  %200 = vperm.xlu0 %199, %v170
  %v201 = vpop.permute.xlu0 %200
  %204 = vset.pattern.permute.xlu0 0
  %205 = vperm.xlu0 %204, %v171
  %v206 = vpop.permute.xlu0 %205
  %209 = vset.pattern.permute.xlu0 0
  %210 = vperm.xlu0 %209, %v172
  %v211 = vpop.permute.xlu0 %210
  %vm213 = vcmask 523264
  %v215 = vsel %vm213, %v157, 0
  %v218 = vsel %vm213, %v158, 0
  %v221 = vsel %vm213, %v159, 0
  %v224 = vsel %vm213, %v160, 0
  %v227 = vsel %vm213, %v161, 0
  %v230 = vsel %vm213, %v162, 0
  %v233 = vsel %vm213, %v163, 0
  %v236 = vsel %vm213, %v164, 0
  %238 = vmatpush.msra.mxu0 0.0
  %239 = vmatpush.msra.mxu0 0.0
  %240 = vmatpush.msra.mxu0 0.0
  %241 = vmatpush.msra.mxu0 0.0
  %242 = vmatpush.msra.mxu0 0.0
  %243 = vmatpush.msra.mxu0 0.0
  %244 = vmatpush.msra.mxu0 0.0
  %245 = vmatpush.msra.mxu0 0.0
  %246 = vmatpush.msra.mxu0 %v156
  %247 = vmatpush.msra.mxu0 %v155
  %248 = vmatpush.msra.mxu0 %v154
  %249 = vmatpush.msra.mxu0 %v153
  %250 = vmatpush.msra.mxu0 %v152
  %251 = vmatpush.msra.mxu0 %v151
  %252 = vmatpush.msra.mxu0 %v150
  %253 = vmatpush.msra.mxu0 %v149
  %254 = vmatmul.f32.gmra.mxu0 %v215
  %v255 = vpop.f32.mrf.mxu0
  %v256 = vadd.f32 %v176, %v255
  %257 = vmatmul.f32.gmra.mxu0 %v218
  %v258 = vpop.f32.mrf.mxu0
  %v259 = vadd.f32 %v181, %v258
  %260 = vmatmul.f32.gmra.mxu0 %v221
  %v261 = vpop.f32.mrf.mxu0
  %v262 = vadd.f32 %v186, %v261
  %263 = vmatmul.f32.gmra.mxu0 %v224
  %v264 = vpop.f32.mrf.mxu0
  %v265 = vadd.f32 %v191, %v264
  %266 = vmatmul.f32.gmra.mxu0 %v227
  %v267 = vpop.f32.mrf.mxu0
  %v268 = vadd.f32 %v196, %v267
  %269 = vmatmul.f32.gmra.mxu0 %v230
  %v270 = vpop.f32.mrf.mxu0
  %v271 = vadd.f32 %v201, %v270
  %272 = vmatmul.f32.gmra.mxu0 %v233
  %v273 = vpop.f32.mrf.mxu0
  %v274 = vadd.f32 %v206, %v273
  %275 = vmatmul.f32.gmra.mxu0 %v236
  %v276 = vpop.f32.mrf.mxu0
  %v277 = vadd.f32 %v211, %v276
  %278 = vdwg.mxu0
  %v279 = vmax.f32 %v256, 0.0
  %v280 = vmax.f32 %v259, 0.0
  %v281 = vmax.f32 %v262, 0.0
  %v282 = vmax.f32 %v265, 0.0
  %v283 = vmax.f32 %v268, 0.0
  %v284 = vmax.f32 %v271, 0.0
  %v285 = vmax.f32 %v274, 0.0
  %v286 = vmax.f32 %v277, 0.0
  %v287 = vld [vmem:[%s5] sm:$0xf]
  %v288 = vld [vmem:[%s6] sm:$0xf]
  %290 = vset.pattern.permute.xlu0 0
  %291 = vperm.xlu0 %290, %v288
  %v292 = vpop.permute.xlu0 %291
  %v295 = vsel %vm213, %v287, 0
  %297 = vmatpush.msra.mxu0 0.0
  %298 = vmatpush.msra.mxu0 0.0
  %299 = vmatpush.msra.mxu0 0.0
  %300 = vmatpush.msra.mxu0 0.0
  %301 = vmatpush.msra.mxu0 0.0
  %302 = vmatpush.msra.mxu0 0.0
  %303 = vmatpush.msra.mxu0 0.0
  %304 = vmatpush.msra.mxu0 0.0
  %305 = vmatpush.msra.mxu0 %v286
  %306 = vmatpush.msra.mxu0 %v285
  %307 = vmatpush.msra.mxu0 %v284
  %308 = vmatpush.msra.mxu0 %v283
  %309 = vmatpush.msra.mxu0 %v282
  %310 = vmatpush.msra.mxu0 %v281
  %311 = vmatpush.msra.mxu0 %v280
  %312 = vmatpush.msra.mxu0 %v279
  %313 = vmatmul.f32.gmra.mxu0 %v295
  %v314 = vpop.f32.mrf.mxu0
  %v315 = vadd.f32 %v292, %v314
  %316 = vdwg.mxu0
  %vm317 = vcmask 11264
  %318 = vst.msk [vmem:[%s7] sm:$0xf] %vm317, %v315
  // Predicated region
  $region30: #{tpu_custom_call.1} parent=0 // pred_check
    _
  $region31: #{tpu_custom_call.1} parent=0 // pred_check_branch
    %320 = sbr.rel (0) target = $region33
  $region32: #{tpu_custom_call.1} parent=0 // pred_region
    _
  $region33: #{tpu_custom_call.1} parent=0 // pred_fallthru
    _
  // Predicated region
  $region34: #{tpu_custom_call.1} parent=0 // pred_check
    _
  $region35: #{tpu_custom_call.1} parent=0 // pred_check_branch
    %322 = sbr.rel (0) target = $region37
  $region36: #{tpu_custom_call.1} parent=0 // pred_region
    _
  $region37: #{tpu_custom_call.1} parent=0 // pred_fallthru
    _

</llo_original>
